<compile_context>
chip_gen: v7x
topology: tpu7x:2x2x1
jax: 0.10.0
libtpu: 0.0.40
codegen_flags: <defaults>
</compile_context>

<pallas_src>
import jax
import jax.numpy as jnp
from jax.experimental import pallas as pl
from jax.experimental.pallas import tpu as pltpu

STATE_DIM = 4          # cartpole state dim
HIDDEN = 300           # fc1 output features
OUT = 1                # fc2 output features
EPS = 1e-5             # nn.LayerNorm default eps

HID_PAD = 384          # HIDDEN rounded up to a multiple of 128 (lane width)
MAX_TB = 1024          # max batch rows per grid step (~3 MiB/step of VMEM)
N_VEC = STATE_DIM + 2  # packed resident rows: w1.T (4 rows), b1, gw


def _round_up(x, m):
    return (x + m - 1) // m * m


def _critic_kernel(x_ref, p_ref, scal_ref, o_ref):
    # Packed, VMEM-resident parameters (one constant-index block).
    w1 = p_ref[0:STATE_DIM, :]                     # (4, 384)  fc1 weight (transposed)
    b1 = p_ref[STATE_DIM:STATE_DIM + 1, :]         # (1, 384)  fc1 bias
    gw = p_ref[STATE_DIM + 1:STATE_DIM + 2, :]     # (1, 384)  gamma * w2 (fused)

    # fc1 on the MXU: (TB, 4) @ (4, 384); K=4 is padded in-register only.
    h = jnp.dot(x_ref[...], w1, preferred_element_type=jnp.float32) + b1
    h = jnp.maximum(h, 0.0)                        # ReLU

    # LayerNorm statistics over the 300 real features.  Padded hidden columns
    # of h are exactly zero (w1/b1 pads are zero, relu(0)=0), so the unmasked
    # 384-lane reductions below are exact.  One-pass var = E[h^2] - mean^2 is
    # fine for post-ReLU activations at these magnitudes / 2e-4 tolerance.
    inv_n = 1.0 / HIDDEN
    s_h = jnp.sum(h, axis=-1, keepdims=True)        # (TB, 1)
    s_hh = jnp.sum(h * h, axis=-1, keepdims=True)   # (TB, 1)
    s_gw = jnp.sum(h * gw, axis=-1, keepdims=True)  # (TB, 1)  fc2 dot, gamma folded in

    mean = s_h * inv_n
    var = s_hh * inv_n - mean * mean
    inv_std = jax.lax.rsqrt(var + EPS)

    # Fused LayerNorm-affine + fc2:
    #   fc2(LN(h)) = inv_std * (sum(h*gamma*w2) - mean*sum(gamma*w2))
    #                + dot(beta, w2) + b2
    G = scal_ref[0]
    c = scal_ref[1]
    o_ref[...] = inv_std * (s_gw - mean * G) + c


def prepare_params(w1, b1, gamma, beta, w2, b2):
    """Fuse / pad / pack parameters once (outside the per-call forward).

    Zero padding of columns HIDDEN..HID_PAD keeps the kernel's unmasked
    384-lane reductions exact (gw's pad is zero because gamma/w2 pads are).
    """
    w2v = w2.reshape(-1).astype(jnp.float32)
    gw = gamma.astype(jnp.float32) * w2v            # gamma * w2
    packed = jnp.zeros((N_VEC, HID_PAD), jnp.float32)
    packed = packed.at[0:STATE_DIM, :HIDDEN].set(w1.T.astype(jnp.float32))
    packed = packed.at[STATE_DIM, :HIDDEN].set(b1.astype(jnp.float32))
    packed = packed.at[STATE_DIM + 1, :HIDDEN].set(gw)
    G = jnp.sum(gw)                                 # sum(gamma * w2)
    c = jnp.dot(beta.astype(jnp.float32), w2v) + jnp.asarray(b2, jnp.float32).reshape(())
    scalars = jnp.stack([G, c]).astype(jnp.float32)  # (2,) -> SMEM
    return packed, scalars


def _pick_tb(B):
    # Guarantee >=2 grid steps for moderately sized batches so the "parallel"
    # batch axis shards across both TensorCores on v7x (near-free extra step
    # on v5e/v6e); cap at MAX_TB for large batches.
    if B > 16:
        tb = _round_up(-(-B // 2), 8)   # ceil(B/2), sublane-aligned
    else:
        tb = _round_up(max(B, 1), 8)
    return max(8, min(MAX_TB, tb))


# TODO(synk): the np.ndarray / torch.FloatTensor input coercion in the original
# Critic.forward is host-side Python; critic_forward expects a jnp (B, 4) array.
@jax.jit
def critic_forward(s, packed, scalars):
    """s: (B, STATE_DIM) float32.  Returns (B, 1) float32."""
    B = s.shape[0]
    TB = _pick_tb(B)
    x = s.astype(jnp.float32)

    return pl.pallas_call(
        _critic_kernel,
        out_shape=jax.ShapeDtypeStruct((B, OUT), jnp.float32),
        grid=(pl.cdiv(B, TB),),
        in_specs=[
            pl.BlockSpec((TB, STATE_DIM), lambda i: (i, 0)),     # x (streamed; ragged tail clipped)
            pl.BlockSpec((N_VEC, HID_PAD), lambda i: (0, 0)),    # packed params (VMEM-resident)
            pl.BlockSpec(memory_space=pltpu.MemorySpace.SMEM),   # (G, c) scalars
        ],
        out_specs=pl.BlockSpec((TB, OUT), lambda i: (i, 0)),
        compiler_params=pltpu.CompilerParams(
            dimension_semantics=("parallel",)),
    )(x, packed, scalars)


def init_params(key):
    """PyTorch-style init matching the module's parameter shapes.

    gamma/beta are perturbed from nn.LayerNorm's defaults (ones/zeros) so the
    fused affine path is actually exercised by the correctness checks.
    """
    k1, k2, k3, k4, k5, k6 = jax.random.split(key, 6)
    bound1 = 1.0 / jnp.sqrt(STATE_DIM)
    w1 = jax.random.uniform(k1, (HIDDEN, STATE_DIM), jnp.float32, -bound1, bound1)
    b1 = jax.random.uniform(k2, (HIDDEN,), jnp.float32, -bound1, bound1)
    bound2 = 1.0 / jnp.sqrt(HIDDEN)
    w2 = jax.random.uniform(k3, (OUT, HIDDEN), jnp.float32, -bound2, bound2)
    b2 = jax.random.uniform(k4, (OUT,), jnp.float32, -bound2, bound2)
    gamma = 1.0 + 0.1 * jax.random.normal(k5, (HIDDEN,), jnp.float32)
    beta = 0.1 * jax.random.normal(k6, (HIDDEN,), jnp.float32)
    return w1, b1, gamma, beta, w2, b2


def _reference(s, w1, b1, gamma, beta, w2, b2):
    h = jnp.maximum(s @ w1.T + b1, 0.0)
    mean = h.mean(-1, keepdims=True)
    var = ((h - mean) ** 2).mean(-1, keepdims=True)
    n = (h - mean) / jnp.sqrt(var + EPS) * gamma + beta
    return n @ w2.T + b2


if __name__ == "__main__":
    key = jax.random.PRNGKey(0)
    pkey, xkey = jax.random.split(key)
    raw_params = init_params(pkey)
    params = prepare_params(*raw_params)

    # small example batch (single grid step)
    batch = 8
    s = jax.random.normal(xkey, (batch, STATE_DIM), jnp.float32)
    out = critic_forward(s, *params)
    jax.block_until_ready(out)
    ref = _reference(s, *raw_params)
    assert out.shape == (batch, OUT), out.shape
    assert jnp.allclose(out, ref, atol=2e-4, rtol=2e-4), (out, ref)

    # ragged batch (B < sublane tile): exercises the clipped tail block
    s2 = jax.random.normal(jax.random.PRNGKey(1), (5, STATE_DIM), jnp.float32)
    out2 = critic_forward(s2, *params)
    jax.block_until_ready(out2)
    ref2 = _reference(s2, *raw_params)
    assert out2.shape == (5, OUT), out2.shape
    assert jnp.allclose(out2, ref2, atol=2e-4, rtol=2e-4), (out2, ref2)

    # multi-step grid (>=2 steps -> both TCs on v7x) with a ragged tail block
    s3 = jax.random.normal(jax.random.PRNGKey(2), (1037, STATE_DIM), jnp.float32)
    out3 = critic_forward(s3, *params)
    jax.block_until_ready(out3)
    ref3 = _reference(s3, *raw_params)
    assert out3.shape == (1037, OUT), out3.shape
    assert jnp.allclose(out3, ref3, atol=2e-4, rtol=2e-4), (out3, ref3)

    print("KERNEL_OK")
</pallas_src>

<mosaic_0001>
module attributes {stable_mosaic.version = 11 : i64} {
  func.func @_critic_kernel(%arg0: i32, %arg1: memref<8x4xf32, #tpu.memory_space<vmem>>, %arg2: memref<6x384xf32, #tpu.memory_space<vmem>>, %arg3: memref<2xf32, #tpu.memory_space<smem>>, %arg4: memref<8x1xf32, #tpu.memory_space<vmem>>) attributes {dimension_semantics = [#tpu.dimension_semantics<parallel>], iteration_bounds = array<i64: 1>, scalar_prefetch = 0 : i64, scratch_operands = 0 : i64, tpu.core_type = #tpu.core_type<tc>, window_params = [{transform_indices = @transform_0, window_bounds = array<i64: 8, 4>}, {pipeline_mode = #tpu.pipeline_mode<synchronous>, transform_indices = @transform_1, window_bounds = array<i64: 6, 384>}, {transform_indices = @transform_2, window_bounds = array<i64: 2>}, {transform_indices = @transform_3, window_bounds = array<i64: 8, 1>}]} {
    %c0 = arith.constant 0 : index
    %c0_0 = arith.constant 0 : index
    %0 = vector.load %arg2[%c0, %c0_0] : memref<6x384xf32, #tpu.memory_space<vmem>>, vector<4x384xf32>
    %c4 = arith.constant 4 : index
    %c0_1 = arith.constant 0 : index
    %1 = vector.load %arg2[%c4, %c0_1] : memref<6x384xf32, #tpu.memory_space<vmem>>, vector<1x384xf32>
    %c5 = arith.constant 5 : index
    %c0_2 = arith.constant 0 : index
    %2 = vector.load %arg2[%c5, %c0_2] : memref<6x384xf32, #tpu.memory_space<vmem>>, vector<1x384xf32>
    %c0_3 = arith.constant 0 : index
    %c0_4 = arith.constant 0 : index
    %3 = vector.load %arg1[%c0_3, %c0_4] : memref<8x4xf32, #tpu.memory_space<vmem>>, vector<8x4xf32>
    %cst = arith.constant dense<0.000000e+00> : vector<8x384xf32>
    %4 = tpu.matmul %3, %0, %cst {dimension_numbers = #tpu.dot_dimension_numbers<[1], [0], [0], [1], [0, 0, 1, 1], [], []>} : vector<8x4xf32>, vector<4x384xf32>, vector<8x384xf32> -> vector<8x384xf32>
    %5 = vector.broadcast %1 : vector<1x384xf32> to vector<8x384xf32>
    %6 = arith.addf %4, %5 : vector<8x384xf32>
    %cst_5 = arith.constant 0.000000e+00 : f32
    %7 = vector.broadcast %cst_5 : f32 to vector<8x384xf32>
    %8 = arith.maximumf %6, %7 : vector<8x384xf32>
    %cst_6 = arith.constant dense<0.000000e+00> : vector<8xf32>
    %9 = vector.multi_reduction <add>, %8, %cst_6 [1] : vector<8x384xf32> to vector<8xf32>
    %10 = vector.shape_cast %9 : vector<8xf32> to vector<8x1xf32>
    %11 = arith.mulf %8, %8 : vector<8x384xf32>
    %cst_7 = arith.constant dense<0.000000e+00> : vector<8xf32>
    %12 = vector.multi_reduction <add>, %11, %cst_7 [1] : vector<8x384xf32> to vector<8xf32>
    %13 = vector.shape_cast %12 : vector<8xf32> to vector<8x1xf32>
    %14 = vector.broadcast %2 : vector<1x384xf32> to vector<8x384xf32>
    %15 = arith.mulf %8, %14 : vector<8x384xf32>
    %cst_8 = arith.constant dense<0.000000e+00> : vector<8xf32>
    %16 = vector.multi_reduction <add>, %15, %cst_8 [1] : vector<8x384xf32> to vector<8xf32>
    %17 = vector.shape_cast %16 : vector<8xf32> to vector<8x1xf32>
    %cst_9 = arith.constant 0.00333333341 : f32
    %18 = vector.broadcast %cst_9 : f32 to vector<8x1xf32>
    %19 = arith.mulf %10, %18 : vector<8x1xf32>
    %cst_10 = arith.constant 0.00333333341 : f32
    %20 = vector.broadcast %cst_10 : f32 to vector<8x1xf32>
    %21 = arith.mulf %13, %20 : vector<8x1xf32>
    %22 = arith.mulf %19, %19 : vector<8x1xf32>
    %23 = arith.subf %21, %22 : vector<8x1xf32>
    %cst_11 = arith.constant 9.99999974E-6 : f32
    %24 = vector.broadcast %cst_11 : f32 to vector<8x1xf32>
    %25 = arith.addf %23, %24 : vector<8x1xf32>
    %26 = math.rsqrt %25 : vector<8x1xf32>
    %c0_12 = arith.constant 0 : index
    %27 = memref.load %arg3[%c0_12] : memref<2xf32, #tpu.memory_space<smem>>
    %c1 = arith.constant 1 : index
    %28 = memref.load %arg3[%c1] : memref<2xf32, #tpu.memory_space<smem>>
    %29 = vector.broadcast %27 : f32 to vector<8x1xf32>
    %30 = arith.mulf %19, %29 : vector<8x1xf32>
    %31 = arith.subf %17, %30 : vector<8x1xf32>
    %32 = arith.mulf %26, %31 : vector<8x1xf32>
    %33 = vector.broadcast %28 : f32 to vector<8x1xf32>
    %34 = arith.addf %32, %33 : vector<8x1xf32>
    %c0_13 = arith.constant 0 : index
    %c0_14 = arith.constant 0 : index
    %35 = vector.load %arg4[%c0_13, %c0_14] : memref<8x1xf32, #tpu.memory_space<vmem>>, vector<8x1xf32>
    tpu.vector_store %arg4[%c0_13, %c0_14], %34 {strides = array<i32>} : memref<8x1xf32, #tpu.memory_space<vmem>>, vector<8x1xf32>,
    return
  }
  func.func @transform_0(%arg0: i32) -> (i32, i32) {
    %c0_i32 = arith.constant 0 : i32
    %c0_i32_0 = arith.constant 0 : i32
    return %arg0, %c0_i32 : i32, i32
  }
  func.func @transform_1(%arg0: i32) -> (i32, i32) {
    %c0_i32 = arith.constant 0 : i32
    %c0_i32_0 = arith.constant 0 : i32
    %c0_i32_1 = arith.constant 0 : i32
    return %c0_i32, %c0_i32_0 : i32, i32
  }
  func.func @transform_2(%arg0: i32) -> i32 {
    %c0_i32 = arith.constant 0 : i32
    %c0_i32_0 = arith.constant 0 : i32
    return %c0_i32 : i32
  }
  func.func @transform_3(%arg0: i32) -> (i32, i32) {
    %c0_i32 = arith.constant 0 : i32
    %c0_i32_0 = arith.constant 0 : i32
    return %arg0, %c0_i32 : i32, i32
  }
}

</mosaic_0001>

<llo_original>
// kernel: critic_forward.1
$region0: #{critic_forward.1}
  #allocation0 [shape = 'u32[]', space=smem, size = 0x4, offset = 0x4, fixed_abs, tag = 'smem constant byte address 0x4 - core index']
  #allocation1 [shape = 'u32[144,128]{1,0:T(1,128)}', space=vmem, size = 0x12000, scoped, tag = 'internal scratch']
  %s0 = inlined_call_operand.vmem [shape: f32[8,4], index: 0, kind: input, shape index: {}]
  %s1 = inlined_call_operand.hbm [shape: f32[6,384], index: 1, kind: input, shape index: {}]
  %s2 = inlined_call_operand.vmem [shape: f32[2], index: 2, kind: input, shape index: {}]
  %s3 = inlined_call_operand.vmem [shape: f32[8,1], index: 3, kind: output, shape index: {}]
  %s4 = sld [smem:[#allocation0]]
  $region30: #{critic_forward.1} parent=0
    _
  %s6 = ssub.s32 1, %s4
  %s7 = scalar_select 0, %s6, %s4
  $region1: #{critic_forward.1} parent=0
    #allocation2 [shape = 'u8[12288]{0}', space=vmem, size = 0x3000, scoped, tag = 'input window, operand 1, single buffered']
    #allocation3 [shape = 's32[1]{0}', space=sflag, size = 0x4, scoped, tag = 'scoped memory for critic_forward.1']
    #allocation4 [shape = 's32[1]{0}', space=sflag, size = 0x4, scoped, tag = 'scoped memory for critic_forward.1']
    #allocation5 [shape = 'u8[512]{0}', space=smem, size = 0x200, scoped, tag = 'input window, operand 2, single buffered']
    %8 = vsyncpa [#allocation3], 0
    %9 = vsyncpa [#allocation4], 0
    // Predicated region
    $region2: #{critic_forward.1} parent=1 // pred_check
      _
    $region3: #{critic_forward.1} parent=1 // pred_check_branch
      %11 = sbr.rel (0) target = $region5
    $region4: #{critic_forward.1} parent=1 // pred_region
      _
    $region5: #{critic_forward.1} parent=1 // pred_fallthru
      _
    // Predicated region
    $region6: #{critic_forward.1} parent=1 // pred_check
      _
    $region7: #{critic_forward.1} parent=1 // pred_check_branch
      %13 = sbr.rel (0) target = $region9
    $region8: #{critic_forward.1} parent=1 // pred_region
      %s15 = ssub.s32 384, 384
      %16 = vsyncadd [#allocation3], %s15
      %s18 = sshll.u32 [#allocation2], 4
      %s19 = int_to_ptr.vmem [resolvable:$true] %s18
      %21 = dma.hbm_to_vmem [thread:$0]  %s1, 384, %s19, [#allocation3]
    $region9: #{critic_forward.1} parent=1 // pred_fallthru
      _
    // Predicated region
    $region10: #{critic_forward.1} parent=1 // pred_check
      _
    $region11: #{critic_forward.1} parent=1 // pred_check_branch
      %23 = sbr.rel (0) target = $region13
    $region12: #{critic_forward.1} parent=1 // pred_region
      %s25 = ssub.s32 16, 16
      %26 = vsyncadd [#allocation4], %s25
      %s28 = sshll.u32 %s2, 4
      %s29 = int_to_ptr.vmem [resolvable:$true] %s28
      %31 = dma.vmem_to_smem %s29, 16, [#allocation5], [#allocation4]
    $region13: #{critic_forward.1} parent=1 // pred_fallthru
      _
    // Predicated region
    $region14: #{critic_forward.1} parent=1 // pred_check
      _
    $region15: #{critic_forward.1} parent=1 // pred_check_branch
      %33 = sbr.rel (0) target = $region17
    $region16: #{critic_forward.1} parent=1 // pred_region
      %34 = dma.done [#allocation3], 384
    $region17: #{critic_forward.1} parent=1 // pred_fallthru
      _
    // Predicated region
    $region18: #{critic_forward.1} parent=1 // pred_check
      _
    $region19: #{critic_forward.1} parent=1 // pred_check_branch
      %36 = sbr.rel (0) target = $region21
    $region20: #{critic_forward.1} parent=1 // pred_region
      %37 = dma.done [#allocation4], 16
    $region21: #{critic_forward.1} parent=1 // pred_fallthru
      _
    %38 = sfence
    %v39 = vld [vmem:[#allocation2] sm:$0xf]
    %v40 = vld [vmem:[#allocation2 + $0x8] sm:$0xf]
    %v41 = vld [vmem:[#allocation2 + $0x10] sm:$0xf]
    %s42 = scalar_lea.vmem [#allocation2], 4
    %v43 = vld [vmem:[%s42] ss:$8 sm:$0x7]
    %s44 = scalar_lea.vmem [#allocation2], 5
    %v45 = vld [vmem:[%s44] ss:$8 sm:$0x7]
    %v46 = vld [vmem:[%s0] sm:$0xff]
    %v48 = vlaneseq
    %v49 = vshrl.u32 %v48, 7
    %v50 = vsub.s32 0, %v49
    %v51 = vrot.slane %v43, %v50
    %v52 = vlaneseq
    %v53 = vshrl.u32 %v52, 7
    %v54 = vsub.s32 1, %v53
    %v55 = vrot.slane %v43, %v54
    %v56 = vlaneseq
    %v57 = vshrl.u32 %v56, 7
    %v58 = vsub.s32 2, %v57
    %v59 = vrot.slane %v43, %v58
    %vm63 = vcmask 31744
    %v65 = vsel %vm63, %v46, 0
    %vm67 = vcmask 1043456
    %v69 = vsel %vm67, %v39, 0
    %v72 = vsel %vm67, %v40, 0
    %v75 = vsel %vm67, %v41, 0
    %77 = vmatprep.subr.mxu0 %v72
    %78 = vmatpush1.msra.mxu0 %v69
    %79 = vmatprep.subr.mxu0 0.0
    %80 = vmatpush1.msra.mxu0 0.0
    %81 = vmatprep.subr.mxu0 0.0
    %82 = vmatpush1.msra.mxu0 0.0
    %83 = vmatprep.subr.mxu0 0.0
    %84 = vmatpush1.msra.mxu0 0.0
    %85 = vmatprep.subr.mxu0 0.0
    %86 = vmatpush1.msra.mxu0 0.0
    %87 = vmatprep.subr.mxu0 0.0
    %88 = vmatpush1.msra.mxu0 0.0
    %89 = vmatprep.subr.mxu0 0.0
    %90 = vmatpush1.msra.mxu0 0.0
    %91 = vmatprep.subr.mxu0 0.0
    %92 = vmatpush1.msra.mxu0 0.0
    %93 = vmatprep.subr.mxu0 0.0
    %94 = vmatpush1.msra.mxu0 0.0
    %95 = vmatprep.subr.mxu0 0.0
    %96 = vmatpush1.msra.mxu0 0.0
    %97 = vmatprep.subr.mxu0 0.0
    %98 = vmatpush1.msra.mxu0 0.0
    %99 = vmatprep.subr.mxu0 0.0
    %100 = vmatpush1.msra.mxu0 0.0
    %101 = vmatprep.subr.mxu0 0.0
    %102 = vmatpush1.msra.mxu0 0.0
    %103 = vmatprep.subr.mxu0 0.0
    %104 = vmatpush1.msra.mxu0 0.0
    %105 = vmatprep.subr.mxu0 0.0
    %106 = vmatpush1.msra.mxu0 0.0
    %107 = vmatprep.subr.mxu0 0.0
    %108 = vmatpush1.msra.mxu0 0.0
    %109 = vmatprep.subr.mxu0 0.0
    %110 = vmatpush1.msra.mxu0 0.0
    %111 = vmatprep.subr.mxu0 0.0
    %112 = vmatpush1.msra.mxu0 0.0
    %113 = vmatprep.subr.mxu0 0.0
    %114 = vmatpush1.msra.mxu0 0.0
    %115 = vmatprep.subr.mxu0 0.0
    %116 = vmatpush1.msra.mxu0 0.0
    %117 = vmatprep.subr.mxu0 0.0
    %118 = vmatpush1.msra.mxu0 0.0
    %119 = vmatprep.subr.mxu0 0.0
    %120 = vmatpush1.msra.mxu0 0.0
    %121 = vmatprep.subr.mxu0 0.0
    %122 = vmatpush1.msra.mxu0 0.0
    %123 = vmatprep.subr.mxu0 0.0
    %124 = vmatpush1.msra.mxu0 0.0
    %125 = vmatprep.subr.mxu0 0.0
    %126 = vmatpush1.msra.mxu0 0.0
    %127 = vmatprep.subr.mxu0 0.0
    %128 = vmatpush1.msra.mxu0 0.0
    %129 = vmatprep.subr.mxu0 0.0
    %130 = vmatpush1.msra.mxu0 0.0
    %131 = vmatprep.subr.mxu0 0.0
    %132 = vmatpush1.msra.mxu0 0.0
    %133 = vmatprep.subr.mxu0 0.0
    %134 = vmatpush1.msra.mxu0 0.0
    %135 = vmatprep.subr.mxu0 0.0
    %136 = vmatpush1.msra.mxu0 0.0
    %137 = vmatprep.subr.mxu0 0.0
    %138 = vmatpush1.msra.mxu0 0.0
    %139 = vmatprep.subr.mxu0 0.0
    %140 = vmatpush1.msra.mxu0 0.0
    %141 = vmatprep.mubr.f32.mxu0 0.0
    %142 = vmatmul.mubr.f32.gmra.mrb[0].mxu0 %v65
    %v143 = vpop.f32.mrb[0].mxu0
    %v144 = vadd.f32 %v51, %v143
    %v145 = vpop.f32.mrb[0].mxu0
    %v146 = vadd.f32 %v55, %v145
    %147 = vdwg.mxu0
    %148 = vmatprep.subr.mxu0 0.0
    %149 = vmatpush1.msra.mxu0 %v75
    %150 = vmatprep.subr.mxu0 0.0
    %151 = vmatpush1.msra.mxu0 0.0
    %152 = vmatprep.subr.mxu0 0.0
    %153 = vmatpush1.msra.mxu0 0.0
    %154 = vmatprep.subr.mxu0 0.0
    %155 = vmatpush1.msra.mxu0 0.0
    %156 = vmatprep.subr.mxu0 0.0
    %157 = vmatpush1.msra.mxu0 0.0
    %158 = vmatprep.subr.mxu0 0.0
    %159 = vmatpush1.msra.mxu0 0.0
    %160 = vmatprep.subr.mxu0 0.0
    %161 = vmatpush1.msra.mxu0 0.0
    %162 = vmatprep.subr.mxu0 0.0
    %163 = vmatpush1.msra.mxu0 0.0
    %164 = vmatprep.subr.mxu0 0.0
    %165 = vmatpush1.msra.mxu0 0.0
    %166 = vmatprep.subr.mxu0 0.0
    %167 = vmatpush1.msra.mxu0 0.0
    %168 = vmatprep.subr.mxu0 0.0
    %169 = vmatpush1.msra.mxu0 0.0
    %170 = vmatprep.subr.mxu0 0.0
    %171 = vmatpush1.msra.mxu0 0.0
    %172 = vmatprep.subr.mxu0 0.0
    %173 = vmatpush1.msra.mxu0 0.0
    %174 = vmatprep.subr.mxu0 0.0
    %175 = vmatpush1.msra.mxu0 0.0
    %176 = vmatprep.subr.mxu0 0.0
    %177 = vmatpush1.msra.mxu0 0.0
    %178 = vmatprep.subr.mxu0 0.0
    %179 = vmatpush1.msra.mxu0 0.0
    %180 = vmatprep.subr.mxu0 0.0
    %181 = vmatpush1.msra.mxu0 0.0
    %182 = vmatprep.subr.mxu0 0.0
    %183 = vmatpush1.msra.mxu0 0.0
    %184 = vmatprep.subr.mxu0 0.0
    %185 = vmatpush1.msra.mxu0 0.0
    %186 = vmatprep.subr.mxu0 0.0
    %187 = vmatpush1.msra.mxu0 0.0
    %188 = vmatprep.subr.mxu0 0.0
    %189 = vmatpush1.msra.mxu0 0.0
    %190 = vmatprep.subr.mxu0 0.0
    %191 = vmatpush1.msra.mxu0 0.0
    %192 = vmatprep.subr.mxu0 0.0
    %193 = vmatpush1.msra.mxu0 0.0
    %194 = vmatprep.subr.mxu0 0.0
    %195 = vmatpush1.msra.mxu0 0.0
    %196 = vmatprep.subr.mxu0 0.0
    %197 = vmatpush1.msra.mxu0 0.0
    %198 = vmatprep.subr.mxu0 0.0
    %199 = vmatpush1.msra.mxu0 0.0
    %200 = vmatprep.subr.mxu0 0.0
    %201 = vmatpush1.msra.mxu0 0.0
    %202 = vmatprep.subr.mxu0 0.0
    %203 = vmatpush1.msra.mxu0 0.0
    %204 = vmatprep.subr.mxu0 0.0
    %205 = vmatpush1.msra.mxu0 0.0
    %206 = vmatprep.subr.mxu0 0.0
    %207 = vmatpush1.msra.mxu0 0.0
    %208 = vmatprep.subr.mxu0 0.0
    %209 = vmatpush1.msra.mxu0 0.0
    %210 = vmatprep.subr.mxu0 0.0
    %211 = vmatpush1.msra.mxu0 0.0
    %212 = vmatprep.mubr.f32.mxu0 0.0
    %213 = vmatmul.mubr.f32.gmra.mrb[0].mxu0 %v65
    %v214 = vpop.f32.mrb[0].mxu0
    %v215 = vadd.f32 %v59, %v214
    %v216 = vpop.f32.mrb[0].mxu0
    %217 = vdwg.mxu0
    %v218 = vmax.f32 %v144, 0.0
    %v219 = vmax.f32 %v146, 0.0
    %v220 = vmax.f32 %v215, 0.0
    %v221 = vadd.f32 %v218, %v219
    %v222 = vadd.f32 %v221, %v220
    %223 = vadd.xlane.f32.xlu0 %v222
    %v224 = vpop.xlane.xlu0 %223
    %v225 = vmul.f32 %v218, %v218
    %v226 = vmul.f32 %v219, %v219
    %v227 = vmul.f32 %v220, %v220
    %v228 = vadd.f32 %v225, %v226
    %v229 = vadd.f32 %v228, %v227
    %230 = vadd.xlane.f32.xlu0 %v229
    %v231 = vpop.xlane.xlu0 %230
    %v233 = vlaneseq
    %v234 = vshrl.u32 %v233, 7
    %v235 = vsub.s32 0, %v234
    %v236 = vrot.slane %v45, %v235
    %v237 = vlaneseq
    %v238 = vshrl.u32 %v237, 7
    %v239 = vsub.s32 1, %v238
    %v240 = vrot.slane %v45, %v239
    %v241 = vlaneseq
    %v242 = vshrl.u32 %v241, 7
    %v243 = vsub.s32 2, %v242
    %v244 = vrot.slane %v45, %v243
    %v248 = vmul.f32 %v218, %v236
    %v249 = vmul.f32 %v219, %v240
    %v250 = vmul.f32 %v220, %v244
    %v251 = vadd.f32 %v248, %v249
    %v252 = vadd.f32 %v251, %v250
    %253 = vadd.xlane.f32.xlu0 %v252
    %v254 = vpop.xlane.xlu0 %253
    %v255 = vmul.f32 %v224, 0.0033333334
    %v256 = vmul.f32 %v231, 0.0033333334
    %v257 = vmul.f32 %v255, %v255
    %v258 = vsub.f32 %v256, %v257
    %v259 = vadd.f32 %v258, 1e-05
    %v260 = vrsqrt.pop %v259
    %s261 = sld [smem:[#allocation5]]
    %s262 = sld [smem:[#allocation5 + $0x1]]
    %v263 = vstv %s261
    %v264 = vmul.f32 %v255, %v263
    %v265 = vsub.f32 %v254, %v264
    %v266 = vmul.f32 %v260, %v265
    %v267 = vstv %s262
    %v268 = vadd.f32 %v266, %v267
    %vm269 = vcmask 7168
    %270 = vst.msk [vmem:[%s3] sm:$0xff] %vm269, %v268
    // Predicated region
    $region22: #{critic_forward.1} parent=1 // pred_check
      _
    $region23: #{critic_forward.1} parent=1 // pred_check_branch
      %272 = sbr.rel (0) target = $region25
    $region24: #{critic_forward.1} parent=1 // pred_region
      _
    $region25: #{critic_forward.1} parent=1 // pred_fallthru
      _
    // Predicated region
    $region26: #{critic_forward.1} parent=1 // pred_check
      _
    $region27: #{critic_forward.1} parent=1 // pred_check_branch
      %274 = sbr.rel (0) target = $region29
    $region28: #{critic_forward.1} parent=1 // pred_region
      _
    $region29: #{critic_forward.1} parent=1 // pred_fallthru
      _
    %275 = vsyncpa [#allocation3], 1
    %276 = vsyncpa [#allocation4], 1

</llo_original>
